<compile_context>
chip_gen: v7x
topology: tpu7x:2x2x1
jax: 0.10.0
libtpu: 0.0.40
codegen_flags: <defaults>
</compile_context>

<pallas_src>
import functools

import jax
import jax.numpy as jnp
from jax import lax
from jax.experimental import pallas as pl
from jax.experimental.pallas import tpu as pltpu


def _dadsh_stream_kernel(sv_ref, acc_ref, ss_ref, *,
                         m_rows, tn, nbpc, n_total, needs_mask,
                         accumulate_ss, int_stream):
    """One streamed N-tile.

    sv_ref : (m+L, TN) packed [S; V] tile (compressed stream dtype)
    acc_ref: (L, m+L)  f32 accumulator -> [V S^T | V V^T]  (per core-split)
    ss_ref : (1, 1)    f32 accumulator -> sum(S*S)         (per core-split)
    """
    c = pl.program_id(0)          # core-split index ("parallel")
    k = pl.program_id(1)          # N-tile index     ("arbitrary", reduction)

    @pl.when(k == 0)
    def _init():
        acc_ref[...] = jnp.zeros_like(acc_ref)
        ss_ref[...] = jnp.zeros_like(ss_ref)

    sv = sv_ref[...]                                           # (m+L, TN)

    if needs_mask:
        # Ragged last tile / clamped duplicate tiles: zero out-of-range columns.
        col = (c * nbpc + k) * tn + lax.broadcasted_iota(jnp.int32, (1, tn), 1)
        sv = jnp.where(col < n_total, sv, 0)

    v = sv[m_rows:, :]                                         # (L, TN) = V rows
    if int_stream:
        contrib = lax.dot_general(
            v, sv, (((1,), (1,)), ((), ())),
            preferred_element_type=jnp.int32).astype(jnp.float32)
    else:
        contrib = lax.dot_general(
            v, sv, (((1,), (1,)), ((), ())),
            preferred_element_type=jnp.float32)
    acc_ref[...] += contrib                                    # [V S^T | V V^T]

    if accumulate_ss:
        s = sv[:m_rows, :].astype(jnp.float32)
        ss_ref[...] += jnp.sum(s * s)


def pack_dadsh_stream(S, V, stream_dtype=jnp.bfloat16):
    """Pack S (m, N) and V (L, N) into the (m+L, N) compressed array the kernel
    streams.  +/-1 entries are exact in bf16 / int8 / fp8.  In a training loop,
    build this once per S/V update and pass it via `dadsh_loss(..., sv_packed=)`
    so loss evaluations do no extra HBM pass over S and V."""
    return jnp.concatenate([S.astype(stream_dtype), V.astype(stream_dtype)],
                           axis=0)


def dadsh_loss(Y, U, V, S, W1, W2, index, *,
               code_length, eta, mu, gamma, varphi, delta,
               tn=4096, core_splits=2, stream_dtype=jnp.bfloat16,
               sv_packed=None, s_squared_sum=None):
    """Pallas TPU DADSH loss (forward of DADSH_Loss.forward).

    stream_dtype : dtype used to stream S/V tiles.  bf16 (default) is exact for
        +/-1 and safe on every TPU generation.  Use jnp.int8 on v5e/v6e (native
        int MXU path) or jnp.float8_e4m3fn on v7x for a further 2x byte cut;
        use float32 if S carries arbitrary real similarity weights.
    sv_packed    : optional pre-packed pack_dadsh_stream(S, V) array (skips the
        per-call cast/concat HBM pass).
    s_squared_sum: optional known value of sum(S*S) (== m*N when S is +/-1);
        when given, the per-tile sum-of-squares reduction is skipped.
    """
    Y = jnp.asarray(Y, jnp.float32)
    U = jnp.asarray(U, jnp.float32)
    W1 = jnp.asarray(W1, jnp.float32)
    W2 = jnp.asarray(W2, jnp.float32)

    L, N = V.shape
    m = U.shape[1]
    if L != code_length:
        raise ValueError(f"V.shape[0]={L} != code_length={code_length}")
    if S.shape != (m, N):
        raise ValueError(f"S.shape={S.shape}, expected {(m, N)}")

    if sv_packed is None:
        sv_packed = pack_dadsh_stream(S, V, stream_dtype)
    if sv_packed.shape != (m + L, N):
        raise ValueError(f"sv_packed.shape={sv_packed.shape}, "
                         f"expected {(m + L, N)}")
    stream_dtype = sv_packed.dtype
    itemsize = jnp.dtype(stream_dtype).itemsize
    int_stream = jnp.issubdtype(stream_dtype, jnp.integer)

    # ---- tile / grid selection ---------------------------------------------
    try:
        vmem_cap = int(pltpu.get_tpu_info().vmem_capacity_bytes)
    except Exception:
        vmem_cap = 64 << 20                      # conservative (v7x per-core)
    stream_budget = vmem_cap // 2                # double-buffered stream tiles
    max_cols = max(128, stream_budget // (2 * (m + L) * itemsize))
    tn_eff = max(128, (min(tn, max_cols) // 128) * 128)

    if N <= tn_eff:
        TN, nb = N, 1                            # single full-extent tile
    else:
        TN = tn_eff                              # lane-aligned streamed tile
        nb = pl.cdiv(N, TN)

    splits = max(1, min(core_splits, nb))        # leading 'parallel' axis
    nbpc = pl.cdiv(nb, splits)                   # N-tiles per core-split
    needs_mask = (nb * TN != N) or (splits * nbpc != nb)

    if splits * nbpc > nb:
        # Duplicate tail blocks are clamped in-bounds and fully masked in-kernel.
        def col_block(c, k):
            return jnp.minimum(c * nbpc + k, nb - 1)
    else:
        def col_block(c, k):
            return c * nbpc + k

    kernel = functools.partial(
        _dadsh_stream_kernel,
        m_rows=m, tn=TN, nbpc=nbpc, n_total=N, needs_mask=needs_mask,
        accumulate_ss=(s_squared_sum is None), int_stream=int_stream)

    vmem_need = (2 * (m + L) * TN * itemsize          # double-buffered SV tile
                 + 4 * (L * (m + L) + 8 * 128) * 4    # accumulator out blocks
                 + (4 << 20))                         # headroom
    vmem_limit = int(min(max(vmem_need, 32 << 20), (vmem_cap * 3) // 4))

    acc_parts, ss_parts = pl.pallas_call(
        kernel,
        grid=(splits, nbpc),
        in_specs=[pl.BlockSpec((m + L, TN), lambda c, k: (0, col_block(c, k)))],
        out_specs=(
            pl.BlockSpec((None, L, m + L), lambda c, k: (c, 0, 0)),
            pl.BlockSpec((None, 1, 1), lambda c, k: (c, 0, 0)),
        ),
        out_shape=(
            jax.ShapeDtypeStruct((splits, L, m + L), jnp.float32),
            jax.ShapeDtypeStruct((splits, 1, 1), jnp.float32),
        ),
        compiler_params=pltpu.CompilerParams(
            dimension_semantics=("parallel", "arbitrary"),
            vmem_limit_bytes=vmem_limit),
    )(sv_packed)

    acc = jnp.sum(acc_parts, axis=0)            # (L, m+L) = [V S^T | V V^T]
    vs = acc[:, :m]                             # (L, m)
    vv = acc[:, m:]                             # (L, L)
    if s_squared_sum is not None:
        ss = jnp.asarray(s_squared_sum, jnp.float32)
    else:
        ss = jnp.sum(ss_parts)

    # ---- tiny O(L*m*d) tail in plain JAX (no (m,N) / (d,d) intermediates) ---
    cl = float(code_length)
    A_t = U.T @ W1                              # (m, d) == (W1^T U)^T
    d1 = eta * jnp.sum(U * U)                   # ||U @ I_m||_F^2
    G = U @ U.T                                 # (L, L)
    d2 = mu * jnp.sum(
        (G - (2.0 * m / 3.0) * jnp.eye(L, dtype=jnp.float32)) ** 2)
    d3 = 2.0 * gamma * jnp.sum(jnp.abs(U) * (1.0 - U * U))
    q1 = jnp.sum((Y - A_t) ** 2)                # ||Y^T - W1^T U||_F^2
    Vg = jnp.take(V.astype(jnp.float32), index, axis=1)       # (L, m) gather
    q2 = varphi * jnp.sum((Vg - U) ** 2)
    # hash loss via the trace identity:
    C = A_t @ W2.T                              # (m, L)
    gram = jnp.sum((C @ vv) * C)                # ||(W1^T U)^T (W2^T V)||_F^2
    cross = jnp.sum(A_t * (vs.T @ W2))          # <S, (W1^T U)^T (W2^T V)>
    h = delta * (cl * cl * ss - 2.0 * cl * cross + gram)

    return (d1 + d2 + d3 + h + q1 + q2) / float(N * m)


def dadsh_loss_ref(Y, U, V, S, W1, W2, index, *,
                   code_length, eta, mu, gamma, varphi, delta):
    """Pure-JAX reference mirroring the PyTorch forward (materializes (m, N))."""
    m = index.shape[0]
    L = code_length
    N = V.shape[1]
    d1 = eta * jnp.sum((U @ jnp.eye(m, dtype=U.dtype)) ** 2)
    d2 = mu * jnp.sum((U @ U.T - 2.0 * m / 3.0 * jnp.eye(L, dtype=U.dtype)) ** 2)
    d3 = 2.0 * gamma * jnp.sum(jnp.abs(U) * (1.0 - U ** 2))
    q1 = jnp.sum((Y.T - W1.T @ U) ** 2)
    q2 = varphi * jnp.sum((V[:, index] - U) ** 2)
    h = delta * jnp.sum((L * S - (W1.T @ U).T @ (W2.T @ V)) ** 2)
    return (d1 + d2 + d3 + h + q1 + q2) / (N * m)


def _make_inputs(key, L, m, N, d):
    k = jax.random.split(key, 7)
    Y = jax.random.normal(k[0], (m, d), dtype=jnp.float32)
    U = jnp.tanh(jax.random.normal(k[1], (L, m), dtype=jnp.float32))
    V = jnp.sign(jax.random.normal(k[2], (L, N), dtype=jnp.float32))
    S = jnp.sign(jax.random.normal(k[3], (m, N), dtype=jnp.float32))
    W1 = jax.random.normal(k[4], (L, d), dtype=jnp.float32) * 0.1
    W2 = jax.random.normal(k[5], (L, d), dtype=jnp.float32) * 0.1
    index = jax.random.permutation(k[6], N)[:m].astype(jnp.int32)
    return Y, U, V, S, W1, W2, index


if __name__ == "__main__":
    hp = dict(eta=0.1, mu=0.01, gamma=0.2, varphi=0.5, delta=0.3)

    # --- test 1: tiny shapes, single full-extent tile ------------------------
    L, m, N, d = 8, 16, 32, 16
    Y, U, V, S, W1, W2, index = _make_inputs(jax.random.PRNGKey(0), L, m, N, d)
    f1 = jax.jit(functools.partial(dadsh_loss, code_length=L, **hp))
    loss1 = jax.block_until_ready(f1(Y, U, V, S, W1, W2, index))
    ref1 = dadsh_loss_ref(Y, U, V, S, W1, W2, index, code_length=L, **hp)
    assert jnp.allclose(loss1, ref1, rtol=1e-3, atol=1e-3), (loss1, ref1)

    # --- test 2: multi-tile stream, 2-way core split, evenly divided ---------
    L2, m2, N2, d2 = 16, 32, 1280, 24
    Y2, U2, V2, S2, W12, W22, i2 = _make_inputs(
        jax.random.PRNGKey(1), L2, m2, N2, d2)
    f2 = jax.jit(functools.partial(dadsh_loss, code_length=L2, tn=128, **hp))
    loss2 = jax.block_until_ready(f2(Y2, U2, V2, S2, W12, W22, i2))
    ref2 = dadsh_loss_ref(Y2, U2, V2, S2, W12, W22, i2, code_length=L2, **hp)
    assert jnp.allclose(loss2, ref2, rtol=2e-3, atol=1e-3), (loss2, ref2)

    # --- test 3: ragged last tile + clamped duplicate block on the split,
    #             pre-packed stream and sum(S^2)=m*N shortcut ------------------
    L3, m3, N3, d3 = 16, 24, 1100, 40
    Y3, U3, V3, S3, W13, W23, i3 = _make_inputs(
        jax.random.PRNGKey(2), L3, m3, N3, d3)
    sv3 = pack_dadsh_stream(S3, V3)             # built once in a training loop
    f3 = jax.jit(functools.partial(dadsh_loss, code_length=L3, tn=128,
                                   s_squared_sum=float(m3 * N3), **hp))
    loss3 = jax.block_until_ready(
        f3(Y3, U3, V3, S3, W13, W23, i3, sv_packed=sv3))
    ref3 = dadsh_loss_ref(Y3, U3, V3, S3, W13, W23, i3, code_length=L3, **hp)
    assert jnp.allclose(loss3, ref3, rtol=2e-3, atol=1e-3), (loss3, ref3)

    print("KERNEL_OK")
</pallas_src>

<mosaic_0001>
module attributes {stable_mosaic.version = 11 : i64} {
  func.func @_dadsh_stream_kernel(%arg0: i32, %arg1: i32, %arg2: memref<24x32xbf16, #tpu.memory_space<vmem>>, %arg3: memref<1x8x24xf32, #tpu.memory_space<vmem>>, %arg4: memref<1x1x1xf32, #tpu.memory_space<vmem>>) attributes {dimension_semantics = [#tpu.dimension_semantics<parallel>, #tpu.dimension_semantics<arbitrary>], iteration_bounds = array<i64: 1, 1>, scalar_prefetch = 0 : i64, scratch_operands = 0 : i64, tpu.core_type = #tpu.core_type<tc>, window_params = [{transform_indices = @transform_0, window_bounds = array<i64: 24, 32>}, {transform_indices = @transform_1, window_bounds = array<i64: 1, 8, 24>}, {transform_indices = @transform_2, window_bounds = array<i64: 1, 1, 1>}]} {
    %c0_i32 = arith.constant 0 : i32
    %0 = arith.cmpi eq, %arg1, %c0_i32 : i32
    %1 = arith.extui %0 : i1 to i32
    %c0_i32_0 = arith.constant 0 : i32
    %2 = arith.cmpi ne, %1, %c0_i32_0 : i32
    scf.if %2 {
      %cst_15 = arith.constant 0.000000e+00 : f32
      %26 = vector.broadcast %cst_15 : f32 to vector<8x24xf32>
      %c0_16 = arith.constant 0 : index
      %c0_17 = arith.constant 0 : index
      %c0_18 = arith.constant 0 : index
      %27 = vector.load %arg3[%c0_16, %c0_17, %c0_18] : memref<1x8x24xf32, #tpu.memory_space<vmem>>, vector<1x8x24xf32>
      %28 = vector.shape_cast %27 : vector<1x8x24xf32> to vector<8x24xf32>
      %29 = vector.shape_cast %26 : vector<8x24xf32> to vector<1x8x24xf32>
      tpu.vector_store %arg3[%c0_16, %c0_17, %c0_18], %29 {strides = array<i32>} : memref<1x8x24xf32, #tpu.memory_space<vmem>>, vector<1x8x24xf32>,
      %cst_19 = arith.constant 0.000000e+00 : f32
      %30 = vector.broadcast %cst_19 : f32 to vector<1x1xf32>
      %c0_20 = arith.constant 0 : index
      %c0_21 = arith.constant 0 : index
      %c0_22 = arith.constant 0 : index
      %31 = vector.load %arg4[%c0_20, %c0_21, %c0_22] : memref<1x1x1xf32, #tpu.memory_space<vmem>>, vector<1x1x1xf32>
      %32 = vector.shape_cast %31 : vector<1x1x1xf32> to vector<1x1xf32>
      %33 = vector.shape_cast %30 : vector<1x1xf32> to vector<1x1x1xf32>
      tpu.vector_store %arg4[%c0_20, %c0_21, %c0_22], %33 {strides = array<i32>} : memref<1x1x1xf32, #tpu.memory_space<vmem>>, vector<1x1x1xf32>,
    } else {
    }
    %c0 = arith.constant 0 : index
    %c0_1 = arith.constant 0 : index
    %3 = vector.load %arg2[%c0, %c0_1] : memref<24x32xbf16, #tpu.memory_space<vmem>>, vector<24x32xbf16>
    %4 = vector.extract_strided_slice %3 {offsets = [16, 0], sizes = [8, 32], strides = [1, 1]} : vector<24x32xbf16> to vector<8x32xbf16>
    %cst = arith.constant dense<0.000000e+00> : vector<8x24xf32>
    %5 = tpu.matmul %4, %3, %cst {dimension_numbers = #tpu.dot_dimension_numbers<[1], [1], [0], [0], [0, 0, 1, 0], [], []>} : vector<8x32xbf16>, vector<24x32xbf16>, vector<8x24xf32> -> vector<8x24xf32>
    %c0_2 = arith.constant 0 : index
    %c0_3 = arith.constant 0 : index
    %c0_4 = arith.constant 0 : index
    %6 = vector.load %arg3[%c0_2, %c0_3, %c0_4] : memref<1x8x24xf32, #tpu.memory_space<vmem>>, vector<1x8x24xf32>
    %7 = vector.shape_cast %6 : vector<1x8x24xf32> to vector<8x24xf32>
    %8 = arith.addf %7, %5 : vector<8x24xf32>
    %c0_5 = arith.constant 0 : index
    %c0_6 = arith.constant 0 : index
    %c0_7 = arith.constant 0 : index
    %9 = vector.load %arg3[%c0_5, %c0_6, %c0_7] : memref<1x8x24xf32, #tpu.memory_space<vmem>>, vector<1x8x24xf32>
    %10 = vector.shape_cast %9 : vector<1x8x24xf32> to vector<8x24xf32>
    %11 = vector.shape_cast %8 : vector<8x24xf32> to vector<1x8x24xf32>
    tpu.vector_store %arg3[%c0_5, %c0_6, %c0_7], %11 {strides = array<i32>} : memref<1x8x24xf32, #tpu.memory_space<vmem>>, vector<1x8x24xf32>,
    %12 = vector.extract_strided_slice %3 {offsets = [0, 0], sizes = [16, 32], strides = [1, 1]} : vector<24x32xbf16> to vector<16x32xbf16>
    %13 = arith.extf %12 : vector<16x32xbf16> to vector<16x32xf32>
    %c0_8 = arith.constant 0 : index
    %c0_9 = arith.constant 0 : index
    %c0_10 = arith.constant 0 : index
    %14 = vector.load %arg4[%c0_8, %c0_9, %c0_10] : memref<1x1x1xf32, #tpu.memory_space<vmem>>, vector<1x1x1xf32>
    %15 = vector.shape_cast %14 : vector<1x1x1xf32> to vector<1x1xf32>
    %16 = arith.mulf %13, %13 : vector<16x32xf32>
    %17 = vector.shape_cast %16 : vector<16x32xf32> to vector<1x16x32xf32>
    %cst_11 = arith.constant dense<0.000000e+00> : vector<1xf32>
    %18 = vector.multi_reduction <add>, %17, %cst_11 [1, 2] : vector<1x16x32xf32> to vector<1xf32>
    %19 = vector.shape_cast %18 : vector<1xf32> to vector<1x1x1xf32>
    %20 = vector.extract %19[0, 0, 0] : f32 from vector<1x1x1xf32>
    %21 = vector.broadcast %20 : f32 to vector<1x1xf32>
    %22 = arith.addf %15, %21 : vector<1x1xf32>
    %c0_12 = arith.constant 0 : index
    %c0_13 = arith.constant 0 : index
    %c0_14 = arith.constant 0 : index
    %23 = vector.load %arg4[%c0_12, %c0_13, %c0_14] : memref<1x1x1xf32, #tpu.memory_space<vmem>>, vector<1x1x1xf32>
    %24 = vector.shape_cast %23 : vector<1x1x1xf32> to vector<1x1xf32>
    %25 = vector.shape_cast %22 : vector<1x1xf32> to vector<1x1x1xf32>
    tpu.vector_store %arg4[%c0_12, %c0_13, %c0_14], %25 {strides = array<i32>} : memref<1x1x1xf32, #tpu.memory_space<vmem>>, vector<1x1x1xf32>,
    return
  }
  func.func @transform_0(%arg0: i32, %arg1: i32) -> (i32, i32) {
    %c1_i32 = arith.constant 1 : i32
    %0 = arith.muli %arg0, %c1_i32 : i32
    %1 = arith.addi %0, %arg1 : i32
    %c0_i32 = arith.constant 0 : i32
    %c0_i32_0 = arith.constant 0 : i32
    return %c0_i32, %1 : i32, i32
  }
  func.func @transform_1(%arg0: i32, %arg1: i32) -> (i32, i32, i32) {
    %c0_i32 = arith.constant 0 : i32
    %c0_i32_0 = arith.constant 0 : i32
    %c0_i32_1 = arith.constant 0 : i32
    return %arg0, %c0_i32, %c0_i32_0 : i32, i32, i32
  }
  func.func @transform_2(%arg0: i32, %arg1: i32) -> (i32, i32, i32) {
    %c0_i32 = arith.constant 0 : i32
    %c0_i32_0 = arith.constant 0 : i32
    %c0_i32_1 = arith.constant 0 : i32
    return %arg0, %c0_i32, %c0_i32_0 : i32, i32, i32
  }
}

</mosaic_0001>

<llo_original>
// kernel: dadsh_loss.1
$region0: #{dadsh_loss.1}
  #allocation0 [shape = 'u32[]', space=smem, size = 0x4, offset = 0x4, fixed_abs, tag = 'smem constant byte address 0x4 - core index']
  #allocation1 [shape = 'u32[144,128]{1,0:T(1,128)}', space=vmem, size = 0x12000, scoped, tag = 'internal scratch']
  %s0 = inlined_call_operand.vmem [shape: bf16[24,32], index: 0, kind: input, shape index: {}]
  %s1 = inlined_call_operand.vmem [shape: f32[1,8,24], index: 1, kind: output, shape index: {0}]
  %s2 = inlined_call_operand.hbm [shape: f32[1,1,1], index: 2, kind: output, shape index: {1}]
  %3 = xla_tuple %s1, %s2
  %s4 = sld [smem:[#allocation0]]
  $region26: #{dadsh_loss.1} parent=0
    _
  %s6 = ssub.s32 1, %s4
  %s7 = scalar_select 0, %s6, %s4
  $region1: #{dadsh_loss.1} parent=0
    #allocation2 [shape = 'u8[512]{0}', space=vmem, size = 0x400, scoped, tag = 'output window, operand 1, single buffered']
    #allocation3 [shape = 's32[1]{0}', space=sflag, size = 0x4, scoped, tag = 'scoped memory for dadsh_loss.1']
    %8 = vsyncpa [#allocation3], 0
    // Predicated region
    $region2: #{dadsh_loss.1} parent=1 // pred_check
      _
    $region3: #{dadsh_loss.1} parent=1 // pred_check_branch
      %10 = sbr.rel (0) target = $region5
    $region4: #{dadsh_loss.1} parent=1 // pred_region
      %s11 = sadd.s32 0, 0
      %p12 = scmp.lt.s32.totalorder %s11, 0
      %s13 = scalar_select %p12, %s11, 0
      %s14 = smul.addr %s13, 4
      %s15 = scalar_lea.vmem %s0, %s14
      %s16 = sadd.s32 0, 0
    $region5: #{dadsh_loss.1} parent=1 // pred_fallthru
      _
    %s17 = sadd.s32 0, 0
    %p18 = scmp.lt.s32.totalorder %s17, 0
    %s19 = scalar_select %p18, %s17, 0
    %s20 = smul.addr %s19, 4
    %s21 = scalar_lea.vmem %s0, %s20
    %s22 = sadd.s32 0, 0
    %p23 = scmp.lt.s32.totalorder %s22, 0
    %s24 = scalar_select %p23, %s22, 0
    %s25 = smul.addr %s24, 4
    %s26 = scalar_lea.vmem %s0, %s25
    %s27 = sadd.s32 0, 0
    %p29 = scmp.eq.s32.totalorder 0, 0
    // Predicated region
    $region6: #{dadsh_loss.1} parent=1 // pred_check
      %p30 = pneg %p29
    $region7: #{dadsh_loss.1} parent=1 // pred_check_branch
      %32 = sbr.rel (%p30) target = $region9
    $region8: #{dadsh_loss.1} parent=1 // pred_region
      %vm33 = vcmask 195584
      %34 = vst.msk [vmem:[%s1] sm:$0xff] %vm33, 0.0
      %vm35 = vcmask 0
      %36 = vst.msk [vmem:[#allocation2] sm:$0x1] %vm35, 0.0
    $region9: #{dadsh_loss.1} parent=1 // pred_fallthru
      _
    %v37 = vld [vmem:[%s26] sm:$0xf]
    %v38 = vld [vmem:[%s26 + $0x4] sm:$0xf]
    %v39 = vld [vmem:[%s26 + $0x8] sm:$0xf]
    %v43 = vunpack.c.l.b16 %v37
    %v44 = vunpack.c.l.b16 %v38
    %v45 = vunpack.c.l.b16 %v39
    %v46 = vpack.c.b16 %v44, %v43
    %v47 = vpack.c.b16 %v45, %v45
    %vm48 = vcmask 261120
    %v50 = vsel %vm48, %v39, 0
    %v53 = vsel %vm48, %v46, 0
    %v56 = vsel %vm48, %v47, 0
    %58 = vmatprep.subr.bf16.mxu0 0
    %59 = vmatpush1.bf16.xpose.msra.mxu0 %v53
    %60 = vmatprep.subr.bf16.mxu0 0
    %61 = vmatpush1.bf16.xpose.msra.mxu0 %v56
    %62 = vmatprep.subr.bf16.mxu0 0
    %63 = vmatpush1.bf16.xpose.msra.mxu0 0
    %64 = vmatprep.subr.bf16.mxu0 0
    %65 = vmatpush1.bf16.xpose.msra.mxu0 0
    %66 = vmatprep.subr.bf16.mxu0 0
    %67 = vmatpush1.bf16.xpose.msra.mxu0 0
    %68 = vmatprep.subr.bf16.mxu0 0
    %69 = vmatpush1.bf16.xpose.msra.mxu0 0
    %70 = vmatprep.subr.bf16.mxu0 0
    %71 = vmatpush1.bf16.xpose.msra.mxu0 0
    %72 = vmatprep.subr.bf16.mxu0 0
    %73 = vmatpush1.bf16.xpose.msra.mxu0 0
    %74 = vmatprep.subr.bf16.mxu0 0
    %75 = vmatpush1.bf16.xpose.msra.mxu0 0
    %76 = vmatprep.subr.bf16.mxu0 0
    %77 = vmatpush1.bf16.xpose.msra.mxu0 0
    %78 = vmatprep.subr.bf16.mxu0 0
    %79 = vmatpush1.bf16.xpose.msra.mxu0 0
    %80 = vmatprep.subr.bf16.mxu0 0
    %81 = vmatpush1.bf16.xpose.msra.mxu0 0
    %82 = vmatprep.subr.bf16.mxu0 0
    %83 = vmatpush1.bf16.xpose.msra.mxu0 0
    %84 = vmatprep.subr.bf16.mxu0 0
    %85 = vmatpush1.bf16.xpose.msra.mxu0 0
    %86 = vmatprep.subr.bf16.mxu0 0
    %87 = vmatpush1.bf16.xpose.msra.mxu0 0
    %88 = vmatprep.subr.bf16.mxu0 0
    %89 = vmatpush1.bf16.xpose.msra.mxu0 0
    %90 = vmatprep.mubr.bf16.mxu0 0
    %91 = vmatmul.mubr.bf16.gmra.mrb[0].mxu0 %v50
    %v92 = vpop.f32.mrb[0].mxu0
    %v93 = vadd.f32 0.0, %v92
    %v94 = vpop.f32.mrb[0].mxu0
    %v95 = vpop.f32.mrb[0].mxu0
    %v96 = vpop.f32.mrb[0].mxu0
    %97 = vdwg.mxu0
    %v98 = vld [vmem:[%s1] sm:$0xff]
    %v99 = vadd.f32 %v98, %v93
    %vm100 = vcmask 195584
    %101 = vst.msk [vmem:[%s1] sm:$0xff] %vm100, %v99
    %v102 = vunpack.c.l.bf16 %v37
    %v103 = vunpack.c.l.bf16 %v38
    %v104 = vld [vmem:[#allocation2] sm:$0x1]
    %v105 = vmul.f32 %v102, %v102
    %v106 = vmul.f32 %v103, %v103
    %v107 = vsel %vm48, %v105, 0.0
    %v108 = vsel %vm48, %v106, 0.0
    %v109 = vadd.f32 %v107, %v108
    %110 = vadd.xlane.f32.xlu0 %v109
    %v111 = vpop.xlane.xlu0 %110
    %v112 = vrot.slane %v111, 4
    %v113 = vadd.f32 %v111, %v112
    %v114 = vrot.slane %v113, 2
    %v115 = vadd.f32 %v113, %v114
    %v116 = vrot.slane %v115, 1
    %v117 = vadd.f32 %v115, %v116
    %s118 = vtos %v117
    %v119 = vstv %s118
    %v120 = vadd.f32 %v104, %v119
    %vm121 = vcmask 0
    %122 = vst.msk [vmem:[#allocation2] sm:$0x1] %vm121, %v120
    // Predicated region
    $region10: #{dadsh_loss.1} parent=1 // pred_check
      _
    $region11: #{dadsh_loss.1} parent=1 // pred_check_branch
      %124 = sbr.rel (0) target = $region13
    $region12: #{dadsh_loss.1} parent=1 // pred_region
      _
    $region13: #{dadsh_loss.1} parent=1 // pred_fallthru
      _
    // Predicated region
    $region14: #{dadsh_loss.1} parent=1 // pred_check
      _
    $region15: #{dadsh_loss.1} parent=1 // pred_check_branch
      %126 = sbr.rel (0) target = $region17
    $region16: #{dadsh_loss.1} parent=1 // pred_region
      %s128 = ssub.s32 16, 16
      %129 = vsyncadd [#allocation3], %s128
      %s131 = sshll.u32 [#allocation2], 4
      %s132 = int_to_ptr.vmem [resolvable:$true] %s131
      %134 = dma.vmem_to_hbm [thread:$0]  %s132, 16, %s2, [#allocation3]
    $region17: #{dadsh_loss.1} parent=1 // pred_fallthru
      _
    // Predicated region
    $region18: #{dadsh_loss.1} parent=1 // pred_check
      _
    $region19: #{dadsh_loss.1} parent=1 // pred_check_branch
      %136 = sbr.rel (0) target = $region21
    $region20: #{dadsh_loss.1} parent=1 // pred_region
      _
    $region21: #{dadsh_loss.1} parent=1 // pred_fallthru
      _
    // Predicated region
    $region22: #{dadsh_loss.1} parent=1 // pred_check
      _
    $region23: #{dadsh_loss.1} parent=1 // pred_check_branch
      %138 = sbr.rel (0) target = $region25
    $region24: #{dadsh_loss.1} parent=1 // pred_region
      %139 = dma.done [#allocation3], 16
    $region25: #{dadsh_loss.1} parent=1 // pred_fallthru
      _
    %140 = vsyncpa [#allocation3], 1

</llo_original>
